<compile_context>
chip_gen: v7x
topology: tpu7x:2x2x1
jax: 0.10.0
libtpu: 0.0.40
codegen_flags: <defaults>
</compile_context>

<pallas_src>
import functools

import jax
import jax.numpy as jnp
from jax import lax
from jax.experimental import pallas as pl
from jax.experimental.pallas import tpu as pltpu

HIDDEN = 128


def _round_up(n, m):
    return ((n + m - 1) // m) * m


def actor_kernel(x_ref, w1_ref, b1_ref, w2_ref, b2_ref, out_ref, *, scale):
    """One batch tile.

    x_ref  : [TB, D_in]  activations in native row-major layout (batch on sublanes;
                         the first dot's A @ B^T contraction puts batch on lanes)
    w1_ref : [2H, D_in]  fused first layer (rows 0..H-1 = mean head, H..2H-1 = std)
    b1_ref : [2H, 1]
    w2_ref : [2, 2H]     block-diagonal second layer (row 0 -> mean, row 1 -> std)
    b2_ref : [2, 1]
    out_ref: [2, TB]     row 0 = mean, row 1 = std   (lane-dense store)
    """
    # Cast the x stream to the MXU operand dtype (bf16 path); no-op if equal.
    x = x_ref[...].astype(w1_ref.dtype)

    # Fused first layer for both heads in one MXU pass:
    #   h[o, b] = sum_d w1[o, d] * x[b, d]   ->  [2H, TB], f32 accumulation.
    h = lax.dot_general(
        w1_ref[...], x,
        dimension_numbers=(((1,), (1,)), ((), ())),
        preferred_element_type=jnp.float32,
    ) + b1_ref[...]
    h = jnp.maximum(h, 0.0)  # relu in f32 (VPU)

    # Block-diagonal second layer: one [2, 2H] @ [2H, TB] matmul replaces two
    # N=1 matmuls.  Cast h to the weight dtype (bf16 path halves the h VMEM
    # staging traffic / vst pressure); accumulate in f32.
    pre = jnp.dot(
        w2_ref[...], h.astype(w2_ref.dtype), preferred_element_type=jnp.float32
    ) + b2_ref[...]

    # Per-row epilogue on static slices: tanh only on row 0, exp/log1p only on row 1.
    pre_m = pre[0:1, :]
    pre_s = pre[1:2, :]
    out_ref[0:1, :] = jnp.tanh(pre_m) * scale
    # numerically stable softplus: max(x, 0) + log1p(exp(-|x|))
    out_ref[1:2, :] = jnp.maximum(pre_s, 0.0) + jnp.log1p(jnp.exp(-jnp.abs(pre_s)))


def pack_params(params):
    """Fuse the four PyTorch-layout Linear layers into the kernel operands."""
    w1m, w1s = params["w1m"], params["w1s"]          # [H, D_in] each
    h, _ = w1m.shape

    w1 = jnp.concatenate([w1m, w1s], axis=0)         # [2H, D_in]
    b1 = jnp.concatenate([params["b1m"], params["b1s"]]).reshape(2 * h, 1)

    w2 = jnp.zeros((2, 2 * h), jnp.float32)
    w2 = w2.at[0, :h].set(params["w2m"][0]).at[1, h:].set(params["w2s"][0])
    b2 = jnp.concatenate([params["b2m"], params["b2s"]]).reshape(2, 1)

    return {"w1": w1, "b1": b1, "w2": w2, "b2": b2}


def actor_forward(x, packed, scale, *, block_b=4096, use_bf16=True, min_grid=2):
    """x: [B, D_in]. packed: dict from pack_params. scale: python float.

    Returns (mean, std), each [B, 1] f32 (matching the PyTorch module).
    """
    B, d_in = x.shape
    w1, b1, w2, b2 = packed["w1"], packed["b1"], packed["w2"], packed["b2"]
    two_h, d_in_w = w1.shape
    assert d_in_w == d_in, "weight / input feature mismatch"

    # --- batch tile: enforce a lane-dense multiple of 128 -------------------
    block_b = max(128, (int(block_b) // 128) * 128)
    B128 = _round_up(B, 128)
    TB = min(block_b, B128)
    # Keep >= min_grid steps on the "parallel" axis when the batch allows, so
    # v7x's 2 TensorCores both get work (v5e/v6e: single TC, TB just maxes out).
    if min_grid > 1:
        TB = min(TB, max(128, _round_up(pl.cdiv(B128, min_grid), 128)))
    assert TB % 128 == 0
    B_pad = _round_up(B, TB)
    grid = (B_pad // TB,)

    # --- operand dtypes ------------------------------------------------------
    if use_bf16:
        w1 = w1.astype(jnp.bfloat16)
        w2 = w2.astype(jnp.bfloat16)

    if B_pad != B:
        # Only materialization of the x stream: a single fused pad(+cast) op.
        x_dtype = jnp.bfloat16 if use_bf16 else x.dtype
        xk = jnp.zeros((B_pad, d_in), x_dtype).at[:B, :].set(x.astype(x_dtype))
    else:
        # Stream x raw from HBM (cheapest in bytes); the kernel casts on the fly.
        xk = x

    flops = 2 * B_pad * d_in * two_h + 2 * B_pad * two_h * 2
    bytes_accessed = (
        xk.size * xk.dtype.itemsize
        + w1.size * w1.dtype.itemsize
        + b1.size * 4
        + w2.size * w2.dtype.itemsize
        + b2.size * 4
        + 2 * B_pad * 4
    )
    cost = pl.CostEstimate(
        flops=flops, transcendentals=3 * B_pad, bytes_accessed=bytes_accessed
    )

    out = pl.pallas_call(
        functools.partial(actor_kernel, scale=float(scale)),
        out_shape=jax.ShapeDtypeStruct((2, B_pad), jnp.float32),
        grid_spec=pltpu.PrefetchScalarGridSpec(
            num_scalar_prefetch=0,
            grid=grid,
            in_specs=[
                pl.BlockSpec((TB, d_in), lambda i: (i, 0)),      # x tile (pipelined)
                pl.BlockSpec((two_h, d_in), lambda i: (0, 0)),   # resident weights
                pl.BlockSpec((two_h, 1), lambda i: (0, 0)),
                pl.BlockSpec((2, two_h), lambda i: (0, 0)),
                pl.BlockSpec((2, 1), lambda i: (0, 0)),
            ],
            out_specs=pl.BlockSpec((2, TB), lambda i: (0, i)),   # lane-dense [2, TB]
        ),
        compiler_params=pltpu.CompilerParams(
            dimension_semantics=("parallel",),
            vmem_limit_bytes=32 * 1024 * 1024,
        ),
        cost_estimate=cost,
    )(xk, w1, b1, w2, b2)

    mean = out[0, :B].reshape(B, 1)
    std = out[1, :B].reshape(B, 1)
    return mean, std


def init_params(key, d_in, hidden=HIDDEN):
    """Deterministic init mimicking PyTorch nn.Linear default, in PyTorch layout."""
    ks = jax.random.split(key, 8)

    def unif(k, shape, fan_in):
        bound = 1.0 / jnp.sqrt(float(fan_in))
        return jax.random.uniform(k, shape, jnp.float32, -bound, bound)

    return {
        "w1m": unif(ks[0], (hidden, d_in), d_in),
        "b1m": unif(ks[1], (hidden,), d_in),
        "w2m": unif(ks[2], (1, hidden), hidden),
        "b2m": unif(ks[3], (1,), hidden),
        "w1s": unif(ks[4], (hidden, d_in), d_in),
        "b1s": unif(ks[5], (hidden,), d_in),
        "w2s": unif(ks[6], (1, hidden), hidden),
        "b2s": unif(ks[7], (1,), hidden),
    }


def actor_forward_ref(x, params, scale):
    """Pure-JAX reference (PyTorch-layout weights) for validation."""
    h_m = jnp.maximum(x @ params["w1m"].T + params["b1m"], 0.0)
    mean = jnp.tanh(h_m @ params["w2m"].T + params["b2m"]) * scale
    h_s = jnp.maximum(x @ params["w1s"].T + params["b1s"], 0.0)
    std = jax.nn.softplus(h_s @ params["w2s"].T + params["b2s"])
    return mean, std


if __name__ == "__main__":
    # Pendulum-v1: observation dim 3, action range [-2, 2] -> scale = 2.0
    B, D_IN = 8, 3
    OUT_RANGE = (-2.0, 2.0)
    scale = (OUT_RANGE[1] - OUT_RANGE[0]) / 2.0

    key = jax.random.PRNGKey(0)
    k_x, k_p = jax.random.split(key)
    x = jax.random.normal(k_x, (B, D_IN), dtype=jnp.float32)
    params = init_params(k_p, D_IN)
    packed = pack_params(params)

    mean_ref, std_ref = actor_forward_ref(x, params, scale)

    # f32 path (strict check).
    mean, std = actor_forward(x, packed, scale, use_bf16=False)
    jax.block_until_ready((mean, std))
    assert mean.shape == (B, 1) and std.shape == (B, 1)
    assert jnp.allclose(mean, mean_ref, atol=1e-5, rtol=1e-5)
    assert jnp.allclose(std, std_ref, atol=1e-5, rtol=1e-5)

    # Default path: bf16 MXU operands (x / W1 / hidden), f32 accumulation.
    mean_bf, std_bf = actor_forward(x, packed, scale)
    jax.block_until_ready((mean_bf, std_bf))
    assert mean_bf.shape == (B, 1) and std_bf.shape == (B, 1)
    assert jnp.allclose(mean_bf, mean_ref, atol=1e-1)
    assert jnp.allclose(std_bf, std_ref, atol=1e-1)

    print("KERNEL_OK")
</pallas_src>

<mosaic_0001>
module attributes {stable_mosaic.version = 11 : i64} {
  func.func @actor_kernel(%arg0: i32, %arg1: memref<128x3xf32, #tpu.memory_space<vmem>>, %arg2: memref<256x3xf32, #tpu.memory_space<vmem>>, %arg3: memref<256x1xf32, #tpu.memory_space<vmem>>, %arg4: memref<2x256xf32, #tpu.memory_space<vmem>>, %arg5: memref<2x1xf32, #tpu.memory_space<vmem>>, %arg6: memref<2x128xf32, #tpu.memory_space<vmem>>) attributes {dimension_semantics = [#tpu.dimension_semantics<parallel>], iteration_bounds = array<i64: 1>, scalar_prefetch = 0 : i64, scratch_operands = 0 : i64, tpu.core_type = #tpu.core_type<tc>, window_params = [{transform_indices = @transform_0, window_bounds = array<i64: 128, 3>}, {pipeline_mode = #tpu.pipeline_mode<synchronous>, transform_indices = @transform_1, window_bounds = array<i64: 256, 3>}, {pipeline_mode = #tpu.pipeline_mode<synchronous>, transform_indices = @transform_2, window_bounds = array<i64: 256, 1>}, {pipeline_mode = #tpu.pipeline_mode<synchronous>, transform_indices = @transform_3, window_bounds = array<i64: 2, 256>}, {pipeline_mode = #tpu.pipeline_mode<synchronous>, transform_indices = @transform_4, window_bounds = array<i64: 2, 1>}, {transform_indices = @transform_5, window_bounds = array<i64: 2, 128>}]} {
    %c0 = arith.constant 0 : index
    %c0_0 = arith.constant 0 : index
    %0 = vector.load %arg1[%c0, %c0_0] : memref<128x3xf32, #tpu.memory_space<vmem>>, vector<128x3xf32>
    %c0_1 = arith.constant 0 : index
    %c0_2 = arith.constant 0 : index
    %1 = vector.load %arg2[%c0_1, %c0_2] : memref<256x3xf32, #tpu.memory_space<vmem>>, vector<256x3xf32>
    %cst = arith.constant dense<0.000000e+00> : vector<256x128xf32>
    %2 = tpu.matmul %1, %0, %cst {dimension_numbers = #tpu.dot_dimension_numbers<[1], [1], [0], [0], [0, 0, 1, 0], [], []>} : vector<256x3xf32>, vector<128x3xf32>, vector<256x128xf32> -> vector<256x128xf32>
    %c0_3 = arith.constant 0 : index
    %c0_4 = arith.constant 0 : index
    %3 = vector.load %arg3[%c0_3, %c0_4] : memref<256x1xf32, #tpu.memory_space<vmem>>, vector<256x1xf32>
    %4 = vector.broadcast %3 : vector<256x1xf32> to vector<256x128xf32>
    %5 = arith.addf %2, %4 : vector<256x128xf32>
    %cst_5 = arith.constant 0.000000e+00 : f32
    %6 = vector.broadcast %cst_5 : f32 to vector<256x128xf32>
    %7 = arith.maximumf %5, %6 : vector<256x128xf32>
    %c0_6 = arith.constant 0 : index
    %c0_7 = arith.constant 0 : index
    %8 = vector.load %arg4[%c0_6, %c0_7] : memref<2x256xf32, #tpu.memory_space<vmem>>, vector<2x256xf32>
    %cst_8 = arith.constant dense<0.000000e+00> : vector<2x128xf32>
    %9 = tpu.matmul %8, %7, %cst_8 {dimension_numbers = #tpu.dot_dimension_numbers<[1], [0], [0], [1], [0, 0, 1, 1], [], []>} : vector<2x256xf32>, vector<256x128xf32>, vector<2x128xf32> -> vector<2x128xf32>
    %c0_9 = arith.constant 0 : index
    %c0_10 = arith.constant 0 : index
    %10 = vector.load %arg5[%c0_9, %c0_10] : memref<2x1xf32, #tpu.memory_space<vmem>>, vector<2x1xf32>
    %11 = vector.broadcast %10 : vector<2x1xf32> to vector<2x128xf32>
    %12 = arith.addf %9, %11 : vector<2x128xf32>
    %13 = vector.extract_strided_slice %12 {offsets = [0, 0], sizes = [1, 128], strides = [1, 1]} : vector<2x128xf32> to vector<1x128xf32>
    %14 = vector.extract_strided_slice %12 {offsets = [1, 0], sizes = [1, 128], strides = [1, 1]} : vector<2x128xf32> to vector<1x128xf32>
    %15 = math.tanh %13 : vector<1x128xf32>
    %cst_11 = arith.constant 2.000000e+00 : f32
    %16 = vector.broadcast %cst_11 : f32 to vector<1x128xf32>
    %17 = arith.mulf %15, %16 : vector<1x128xf32>
    %c0_12 = arith.constant 0 : index
    %c0_13 = arith.constant 0 : index
    %18 = vector.load %arg6[%c0_12, %c0_13] : memref<2x128xf32, #tpu.memory_space<vmem>>, vector<1x128xf32>
    tpu.vector_store %arg6[%c0_12, %c0_13], %17 {strides = array<i32>} : memref<2x128xf32, #tpu.memory_space<vmem>>, vector<1x128xf32>,
    %cst_14 = arith.constant 0.000000e+00 : f32
    %19 = vector.broadcast %cst_14 : f32 to vector<1x128xf32>
    %20 = arith.maximumf %14, %19 : vector<1x128xf32>
    %21 = math.absf %14 : vector<1x128xf32>
    %cst_15 = arith.constant 0.000000e+00 : f32
    %22 = vector.broadcast %cst_15 : f32 to vector<1x128xf32>
    %23 = arith.subf %22, %21 : vector<1x128xf32>
    %24 = math.exp %23 : vector<1x128xf32>
    %25 = math.log1p %24 : vector<1x128xf32>
    %26 = arith.addf %20, %25 : vector<1x128xf32>
    %c1 = arith.constant 1 : index
    %c0_16 = arith.constant 0 : index
    %27 = vector.load %arg6[%c1, %c0_16] : memref<2x128xf32, #tpu.memory_space<vmem>>, vector<1x128xf32>
    tpu.vector_store %arg6[%c1, %c0_16], %26 {strides = array<i32>} : memref<2x128xf32, #tpu.memory_space<vmem>>, vector<1x128xf32>,
    return
  }
  func.func @transform_0(%arg0: i32) -> (i32, i32) {
    %c0_i32 = arith.constant 0 : i32
    %c0_i32_0 = arith.constant 0 : i32
    return %arg0, %c0_i32 : i32, i32
  }
  func.func @transform_1(%arg0: i32) -> (i32, i32) {
    %c0_i32 = arith.constant 0 : i32
    %c0_i32_0 = arith.constant 0 : i32
    %c0_i32_1 = arith.constant 0 : i32
    return %c0_i32, %c0_i32_0 : i32, i32
  }
  func.func @transform_2(%arg0: i32) -> (i32, i32) {
    %c0_i32 = arith.constant 0 : i32
    %c0_i32_0 = arith.constant 0 : i32
    %c0_i32_1 = arith.constant 0 : i32
    return %c0_i32, %c0_i32_0 : i32, i32
  }
  func.func @transform_3(%arg0: i32) -> (i32, i32) {
    %c0_i32 = arith.constant 0 : i32
    %c0_i32_0 = arith.constant 0 : i32
    %c0_i32_1 = arith.constant 0 : i32
    return %c0_i32, %c0_i32_0 : i32, i32
  }
  func.func @transform_4(%arg0: i32) -> (i32, i32) {
    %c0_i32 = arith.constant 0 : i32
    %c0_i32_0 = arith.constant 0 : i32
    %c0_i32_1 = arith.constant 0 : i32
    return %c0_i32, %c0_i32_0 : i32, i32
  }
  func.func @transform_5(%arg0: i32) -> (i32, i32) {
    %c0_i32 = arith.constant 0 : i32
    %c0_i32_0 = arith.constant 0 : i32
    return %c0_i32, %arg0 : i32, i32
  }
}

</mosaic_0001>

<llo_original>
// kernel: tpu_custom_call.1
$region0: #{tpu_custom_call.1}
  #allocation0 [shape = 'u32[]', space=smem, size = 0x4, offset = 0x4, fixed_abs, tag = 'smem constant byte address 0x4 - core index']
  #allocation1 [shape = 'u32[144,128]{1,0:T(1,128)}', space=vmem, size = 0x12000, scoped, tag = 'internal scratch']
  %s0 = inlined_call_operand.vmem [shape: f32[128,3], index: 0, kind: input, shape index: {}]
  %s1 = inlined_call_operand.vmem [shape: f32[256,3], index: 1, kind: input, shape index: {}]
  %s2 = inlined_call_operand.vmem [shape: f32[256,1], index: 2, kind: input, shape index: {}]
  %s3 = inlined_call_operand.vmem [shape: f32[2,256], index: 3, kind: input, shape index: {}]
  %s4 = inlined_call_operand.vmem [shape: f32[2,1], index: 4, kind: input, shape index: {}]
  %s5 = inlined_call_operand.hbm [shape: f32[2,128], index: 5, kind: output, shape index: {}]
  %s6 = sld [smem:[#allocation0]]
  $region30: #{tpu_custom_call.1} parent=0
    _
  %s8 = ssub.s32 1, %s6
  %s9 = scalar_select 0, %s8, %s6
  $region1: #{tpu_custom_call.1} parent=0
    #allocation2 [shape = 'u8[1024]{0}', space=vmem, size = 0x400, scoped, tag = 'output window, operand 0, single buffered']
    #allocation3 [shape = 's32[1]{0}', space=sflag, size = 0x4, scoped, tag = 'scoped memory for tpu_custom_call.1']
    %10 = vsyncpa [#allocation3], 0
    // Predicated region
    $region2: #{tpu_custom_call.1} parent=1 // pred_check
      _
    $region3: #{tpu_custom_call.1} parent=1 // pred_check_branch
      %12 = sbr.rel (0) target = $region5
    $region4: #{tpu_custom_call.1} parent=1 // pred_region
      _
    $region5: #{tpu_custom_call.1} parent=1 // pred_fallthru
      _
    // Predicated region
    $region6: #{tpu_custom_call.1} parent=1 // pred_check
      _
    $region7: #{tpu_custom_call.1} parent=1 // pred_check_branch
      %14 = sbr.rel (0) target = $region9
    $region8: #{tpu_custom_call.1} parent=1 // pred_region
      _
    $region9: #{tpu_custom_call.1} parent=1 // pred_fallthru
      _
    // Predicated region
    $region10: #{tpu_custom_call.1} parent=1 // pred_check
      _
    $region11: #{tpu_custom_call.1} parent=1 // pred_check_branch
      %16 = sbr.rel (0) target = $region13
    $region12: #{tpu_custom_call.1} parent=1 // pred_region
      _
    $region13: #{tpu_custom_call.1} parent=1 // pred_fallthru
      _
    // Predicated region
    $region14: #{tpu_custom_call.1} parent=1 // pred_check
      _
    $region15: #{tpu_custom_call.1} parent=1 // pred_check_branch
      %18 = sbr.rel (0) target = $region17
    $region16: #{tpu_custom_call.1} parent=1 // pred_region
      _
    $region17: #{tpu_custom_call.1} parent=1 // pred_fallthru
      _
    // Predicated region
    $region18: #{tpu_custom_call.1} parent=1 // pred_check
      _
    $region19: #{tpu_custom_call.1} parent=1 // pred_check_branch
      %20 = sbr.rel (0) target = $region21
    $region20: #{tpu_custom_call.1} parent=1 // pred_region
      _
    $region21: #{tpu_custom_call.1} parent=1 // pred_fallthru
      _
    %v21 = vld [vmem:[%s0] sm:$0xff]
    %v22 = vld [vmem:[%s0 + $0x8] sm:$0xff]
    %v23 = vld [vmem:[%s0 + $0x10] sm:$0xff]
    %v24 = vld [vmem:[%s0 + $0x18] sm:$0xff]
    %v25 = vld [vmem:[%s0 + $0x20] sm:$0xff]
    %v26 = vld [vmem:[%s0 + $0x28] sm:$0xff]
    %v27 = vld [vmem:[%s0 + $0x30] sm:$0xff]
    %v28 = vld [vmem:[%s0 + $0x38] sm:$0xff]
    %v29 = vld [vmem:[%s0 + $0x40] sm:$0xff]
    %v30 = vld [vmem:[%s0 + $0x48] sm:$0xff]
    %v31 = vld [vmem:[%s0 + $0x50] sm:$0xff]
    %v32 = vld [vmem:[%s0 + $0x58] sm:$0xff]
    %v33 = vld [vmem:[%s0 + $0x60] sm:$0xff]
    %v34 = vld [vmem:[%s0 + $0x68] sm:$0xff]
    %v35 = vld [vmem:[%s0 + $0x70] sm:$0xff]
    %v36 = vld [vmem:[%s0 + $0x78] sm:$0xff]
    %v37 = vld [vmem:[%s1] sm:$0xff]
    %v38 = vld [vmem:[%s1 + $0x8] sm:$0xff]
    %v39 = vld [vmem:[%s1 + $0x10] sm:$0xff]
    %v40 = vld [vmem:[%s1 + $0x18] sm:$0xff]
    %v41 = vld [vmem:[%s1 + $0x20] sm:$0xff]
    %v42 = vld [vmem:[%s1 + $0x28] sm:$0xff]
    %v43 = vld [vmem:[%s1 + $0x30] sm:$0xff]
    %v44 = vld [vmem:[%s1 + $0x38] sm:$0xff]
    %v45 = vld [vmem:[%s1 + $0x40] sm:$0xff]
    %v46 = vld [vmem:[%s1 + $0x48] sm:$0xff]
    %v47 = vld [vmem:[%s1 + $0x50] sm:$0xff]
    %v48 = vld [vmem:[%s1 + $0x58] sm:$0xff]
    %v49 = vld [vmem:[%s1 + $0x60] sm:$0xff]
    %v50 = vld [vmem:[%s1 + $0x68] sm:$0xff]
    %v51 = vld [vmem:[%s1 + $0x70] sm:$0xff]
    %v52 = vld [vmem:[%s1 + $0x78] sm:$0xff]
    %v53 = vld [vmem:[%s1 + $0x80] sm:$0xff]
    %v54 = vld [vmem:[%s1 + $0x88] sm:$0xff]
    %v55 = vld [vmem:[%s1 + $0x90] sm:$0xff]
    %v56 = vld [vmem:[%s1 + $0x98] sm:$0xff]
    %v57 = vld [vmem:[%s1 + $0xa0] sm:$0xff]
    %v58 = vld [vmem:[%s1 + $0xa8] sm:$0xff]
    %v59 = vld [vmem:[%s1 + $0xb0] sm:$0xff]
    %v60 = vld [vmem:[%s1 + $0xb8] sm:$0xff]
    %v61 = vld [vmem:[%s1 + $0xc0] sm:$0xff]
    %v62 = vld [vmem:[%s1 + $0xc8] sm:$0xff]
    %v63 = vld [vmem:[%s1 + $0xd0] sm:$0xff]
    %v64 = vld [vmem:[%s1 + $0xd8] sm:$0xff]
    %v65 = vld [vmem:[%s1 + $0xe0] sm:$0xff]
    %v66 = vld [vmem:[%s1 + $0xe8] sm:$0xff]
    %v67 = vld [vmem:[%s1 + $0xf0] sm:$0xff]
    %v68 = vld [vmem:[%s1 + $0xf8] sm:$0xff]
    %v69 = vld [vmem:[%s2] sm:$0xff]
    %v70 = vld [vmem:[%s2 + $0x8] sm:$0xff]
    %v71 = vld [vmem:[%s2 + $0x10] sm:$0xff]
    %v72 = vld [vmem:[%s2 + $0x18] sm:$0xff]
    %v73 = vld [vmem:[%s2 + $0x20] sm:$0xff]
    %v74 = vld [vmem:[%s2 + $0x28] sm:$0xff]
    %v75 = vld [vmem:[%s2 + $0x30] sm:$0xff]
    %v76 = vld [vmem:[%s2 + $0x38] sm:$0xff]
    %v77 = vld [vmem:[%s2 + $0x40] sm:$0xff]
    %v78 = vld [vmem:[%s2 + $0x48] sm:$0xff]
    %v79 = vld [vmem:[%s2 + $0x50] sm:$0xff]
    %v80 = vld [vmem:[%s2 + $0x58] sm:$0xff]
    %v81 = vld [vmem:[%s2 + $0x60] sm:$0xff]
    %v82 = vld [vmem:[%s2 + $0x68] sm:$0xff]
    %v83 = vld [vmem:[%s2 + $0x70] sm:$0xff]
    %v84 = vld [vmem:[%s2 + $0x78] sm:$0xff]
    %v85 = vld [vmem:[%s2 + $0x80] sm:$0xff]
    %v86 = vld [vmem:[%s2 + $0x88] sm:$0xff]
    %v87 = vld [vmem:[%s2 + $0x90] sm:$0xff]
    %v88 = vld [vmem:[%s2 + $0x98] sm:$0xff]
    %v89 = vld [vmem:[%s2 + $0xa0] sm:$0xff]
    %v90 = vld [vmem:[%s2 + $0xa8] sm:$0xff]
    %v91 = vld [vmem:[%s2 + $0xb0] sm:$0xff]
    %v92 = vld [vmem:[%s2 + $0xb8] sm:$0xff]
    %v93 = vld [vmem:[%s2 + $0xc0] sm:$0xff]
    %v94 = vld [vmem:[%s2 + $0xc8] sm:$0xff]
    %v95 = vld [vmem:[%s2 + $0xd0] sm:$0xff]
    %v96 = vld [vmem:[%s2 + $0xd8] sm:$0xff]
    %v97 = vld [vmem:[%s2 + $0xe0] sm:$0xff]
    %v98 = vld [vmem:[%s2 + $0xe8] sm:$0xff]
    %v99 = vld [vmem:[%s2 + $0xf0] sm:$0xff]
    %v100 = vld [vmem:[%s2 + $0xf8] sm:$0xff]
    %102 = vset.pattern.permute.xlu0 0
    %103 = vperm.xlu0 %102, %v69
    %v104 = vpop.permute.xlu0 %103
    %107 = vset.pattern.permute.xlu0 0
    %108 = vperm.xlu0 %107, %v70
    %v109 = vpop.permute.xlu0 %108
    %112 = vset.pattern.permute.xlu0 0
    %113 = vperm.xlu0 %112, %v71
    %v114 = vpop.permute.xlu0 %113
    %117 = vset.pattern.permute.xlu0 0
    %118 = vperm.xlu0 %117, %v72
    %v119 = vpop.permute.xlu0 %118
    %122 = vset.pattern.permute.xlu0 0
    %123 = vperm.xlu0 %122, %v73
    %v124 = vpop.permute.xlu0 %123
    %127 = vset.pattern.permute.xlu0 0
    %128 = vperm.xlu0 %127, %v74
    %v129 = vpop.permute.xlu0 %128
    %132 = vset.pattern.permute.xlu0 0
    %133 = vperm.xlu0 %132, %v75
    %v134 = vpop.permute.xlu0 %133
    %137 = vset.pattern.permute.xlu0 0
    %138 = vperm.xlu0 %137, %v76
    %v139 = vpop.permute.xlu0 %138
    %142 = vset.pattern.permute.xlu0 0
    %143 = vperm.xlu0 %142, %v77
    %v144 = vpop.permute.xlu0 %143
    %147 = vset.pattern.permute.xlu0 0
    %148 = vperm.xlu0 %147, %v78
    %v149 = vpop.permute.xlu0 %148
    %152 = vset.pattern.permute.xlu0 0
    %153 = vperm.xlu0 %152, %v79
    %v154 = vpop.permute.xlu0 %153
    %157 = vset.pattern.permute.xlu0 0
    %158 = vperm.xlu0 %157, %v80
    %v159 = vpop.permute.xlu0 %158
    %162 = vset.pattern.permute.xlu0 0
    %163 = vperm.xlu0 %162, %v81
    %v164 = vpop.permute.xlu0 %163
    %167 = vset.pattern.permute.xlu0 0
    %168 = vperm.xlu0 %167, %v82
    %v169 = vpop.permute.xlu0 %168
    %172 = vset.pattern.permute.xlu0 0
    %173 = vperm.xlu0 %172, %v83
    %v174 = vpop.permute.xlu0 %173
    %177 = vset.pattern.permute.xlu0 0
    %178 = vperm.xlu0 %177, %v84
    %v179 = vpop.permute.xlu0 %178
    %182 = vset.pattern.permute.xlu0 0
    %183 = vperm.xlu0 %182, %v85
    %v184 = vpop.permute.xlu0 %183
    %187 = vset.pattern.permute.xlu0 0
    %188 = vperm.xlu0 %187, %v86
    %v189 = vpop.permute.xlu0 %188
    %192 = vset.pattern.permute.xlu0 0
    %193 = vperm.xlu0 %192, %v87
    %v194 = vpop.permute.xlu0 %193
    %197 = vset.pattern.permute.xlu0 0
    %198 = vperm.xlu0 %197, %v88
    %v199 = vpop.permute.xlu0 %198
    %202 = vset.pattern.permute.xlu0 0
    %203 = vperm.xlu0 %202, %v89
    %v204 = vpop.permute.xlu0 %203
    %207 = vset.pattern.permute.xlu0 0
    %208 = vperm.xlu0 %207, %v90
    %v209 = vpop.permute.xlu0 %208
    %212 = vset.pattern.permute.xlu0 0
    %213 = vperm.xlu0 %212, %v91
    %v214 = vpop.permute.xlu0 %213
    %217 = vset.pattern.permute.xlu0 0
    %218 = vperm.xlu0 %217, %v92
    %v219 = vpop.permute.xlu0 %218
    %222 = vset.pattern.permute.xlu0 0
    %223 = vperm.xlu0 %222, %v93
    %v224 = vpop.permute.xlu0 %223
    %227 = vset.pattern.permute.xlu0 0
    %228 = vperm.xlu0 %227, %v94
    %v229 = vpop.permute.xlu0 %228
    %232 = vset.pattern.permute.xlu0 0
    %233 = vperm.xlu0 %232, %v95
    %v234 = vpop.permute.xlu0 %233
    %237 = vset.pattern.permute.xlu0 0
    %238 = vperm.xlu0 %237, %v96
    %v239 = vpop.permute.xlu0 %238
    %242 = vset.pattern.permute.xlu0 0
    %243 = vperm.xlu0 %242, %v97
    %v244 = vpop.permute.xlu0 %243
    %247 = vset.pattern.permute.xlu0 0
    %248 = vperm.xlu0 %247, %v98
    %v249 = vpop.permute.xlu0 %248
    %252 = vset.pattern.permute.xlu0 0
    %253 = vperm.xlu0 %252, %v99
    %v254 = vpop.permute.xlu0 %253
    %257 = vset.pattern.permute.xlu0 0
    %258 = vperm.xlu0 %257, %v100
    %v259 = vpop.permute.xlu0 %258
    %vm261 = vcmask 23552
    %v263 = vsel %vm261, %v37, 0
    %v266 = vsel %vm261, %v38, 0
    %v269 = vsel %vm261, %v39, 0
    %v272 = vsel %vm261, %v40, 0
    %v275 = vsel %vm261, %v41, 0
    %v278 = vsel %vm261, %v42, 0
    %v281 = vsel %vm261, %v43, 0
    %v284 = vsel %vm261, %v44, 0
    %v287 = vsel %vm261, %v45, 0
    %v290 = vsel %vm261, %v46, 0
    %v293 = vsel %vm261, %v47, 0
    %v296 = vsel %vm261, %v48, 0
    %v299 = vsel %vm261, %v49, 0
    %v302 = vsel %vm261, %v50, 0
    %v305 = vsel %vm261, %v51, 0
    %v308 = vsel %vm261, %v52, 0
    %v311 = vsel %vm261, %v53, 0
    %v314 = vsel %vm261, %v54, 0
    %v317 = vsel %vm261, %v55, 0
    %v320 = vsel %vm261, %v56, 0
    %v323 = vsel %vm261, %v57, 0
    %v326 = vsel %vm261, %v58, 0
    %v329 = vsel %vm261, %v59, 0
    %v332 = vsel %vm261, %v60, 0
    %v335 = vsel %vm261, %v61, 0
    %v338 = vsel %vm261, %v62, 0
    %v341 = vsel %vm261, %v63, 0
    %v344 = vsel %vm261, %v64, 0
    %v347 = vsel %vm261, %v65, 0
    %v350 = vsel %vm261, %v66, 0
    %v353 = vsel %vm261, %v67, 0
    %v356 = vsel %vm261, %v68, 0
    %v359 = vsel %vm261, %v21, 0
    %v362 = vsel %vm261, %v22, 0
    %v365 = vsel %vm261, %v23, 0
    %v368 = vsel %vm261, %v24, 0
    %v371 = vsel %vm261, %v25, 0
    %v374 = vsel %vm261, %v26, 0
    %v377 = vsel %vm261, %v27, 0
    %v380 = vsel %vm261, %v28, 0
    %v383 = vsel %vm261, %v29, 0
    %v386 = vsel %vm261, %v30, 0
    %v389 = vsel %vm261, %v31, 0
    %v392 = vsel %vm261, %v32, 0
    %v395 = vsel %vm261, %v33, 0
    %v398 = vsel %vm261, %v34, 0
    %v401 = vsel %vm261, %v35, 0
    %v404 = vsel %vm261, %v36, 0
    %406 = vmatprep.subr.mxu0 0.0
    %407 = vmatpush1.xpose.msra.mxu0 %v359
    %408 = vmatprep.subr.mxu0 0.0
    %409 = vmatpush1.xpose.msra.mxu0 %v362
    %410 = vmatprep.subr.mxu0 0.0
    %411 = vmatpush1.xpose.msra.mxu0 %v365
    %412 = vmatprep.subr.mxu0 0.0
    %413 = vmatpush1.xpose.msra.mxu0 %v368
    %414 = vmatprep.subr.mxu0 0.0
    %415 = vmatpush1.xpose.msra.mxu0 %v371
    %416 = vmatprep.subr.mxu0 0.0
    %417 = vmatpush1.xpose.msra.mxu0 %v374
    %418 = vmatprep.subr.mxu0 0.0
    %419 = vmatpush1.xpose.msra.mxu0 %v377
    %420 = vmatprep.subr.mxu0 0.0
    %421 = vmatpush1.xpose.msra.mxu0 %v380
    %422 = vmatprep.subr.mxu0 0.0
    %423 = vmatpush1.xpose.msra.mxu0 %v383
    %424 = vmatprep.subr.mxu0 0.0
    %425 = vmatpush1.xpose.msra.mxu0 %v386
    %426 = vmatprep.subr.mxu0 0.0
    %427 = vmatpush1.xpose.msra.mxu0 %v389
    %428 = vmatprep.subr.mxu0 0.0
    %429 = vmatpush1.xpose.msra.mxu0 %v392
    %430 = vmatprep.subr.mxu0 0.0
    %431 = vmatpush1.xpose.msra.mxu0 %v395
    %432 = vmatprep.subr.mxu0 0.0
    %433 = vmatpush1.xpose.msra.mxu0 %v398
    %434 = vmatprep.subr.mxu0 0.0
    %435 = vmatpush1.xpose.msra.mxu0 %v401
    %436 = vmatprep.subr.mxu0 0.0
    %437 = vmatpush1.xpose.msra.mxu0 %v404
    %438 = vmatprep.subr.mxu0 0.0
    %439 = vmatpush1.xpose.msra.mxu0 0.0
    %440 = vmatprep.subr.mxu0 0.0
    %441 = vmatpush1.xpose.msra.mxu0 0.0
    %442 = vmatprep.subr.mxu0 0.0
    %443 = vmatpush1.xpose.msra.mxu0 0.0
    %444 = vmatprep.subr.mxu0 0.0
    %445 = vmatpush1.xpose.msra.mxu0 0.0
    %446 = vmatprep.subr.mxu0 0.0
    %447 = vmatpush1.xpose.msra.mxu0 0.0
    %448 = vmatprep.subr.mxu0 0.0
    %449 = vmatpush1.xpose.msra.mxu0 0.0
    %450 = vmatprep.subr.mxu0 0.0
    %451 = vmatpush1.xpose.msra.mxu0 0.0
    %452 = vmatprep.subr.mxu0 0.0
    %453 = vmatpush1.xpose.msra.mxu0 0.0
    %454 = vmatprep.subr.mxu0 0.0
    %455 = vmatpush1.xpose.msra.mxu0 0.0
    %456 = vmatprep.subr.mxu0 0.0
    %457 = vmatpush1.xpose.msra.mxu0 0.0
    %458 = vmatprep.subr.mxu0 0.0
    %459 = vmatpush1.xpose.msra.mxu0 0.0
    %460 = vmatprep.subr.mxu0 0.0
    %461 = vmatpush1.xpose.msra.mxu0 0.0
    %462 = vmatprep.subr.mxu0 0.0
    %463 = vmatpush1.xpose.msra.mxu0 0.0
    %464 = vmatprep.subr.mxu0 0.0
    %465 = vmatpush1.xpose.msra.mxu0 0.0
    %466 = vmatprep.subr.mxu0 0.0
    %467 = vmatpush1.xpose.msra.mxu0 0.0
    %468 = vmatprep.subr.mxu0 0.0
    %469 = vmatpush1.xpose.msra.mxu0 0.0
    %470 = vmatprep.mubr.f32.mxu0 0.0
    %471 = vmatmul.mubr.f32.gmra.mrb[0].mxu0 %v263
    %v472 = vpop.f32.mrb[0].mxu0
    %v473 = vadd.f32 %v104, %v472
    %v474 = vpop.f32.mrb[0].mxu0
    %475 = vmatprep.mubr.f32.mxu0 0.0
    %476 = vmatmul.mubr.f32.gmra.mrb[0].mxu0 %v266
    %v477 = vpop.f32.mrb[0].mxu0
    %v478 = vadd.f32 %v109, %v477
    %v479 = vpop.f32.mrb[0].mxu0
    %480 = vmatprep.mubr.f32.mxu0 0.0
    %481 = vmatmul.mubr.f32.gmra.mrb[0].mxu0 %v269
    %v482 = vpop.f32.mrb[0].mxu0
    %v483 = vadd.f32 %v114, %v482
    %v484 = vpop.f32.mrb[0].mxu0
    %485 = vmatprep.mubr.f32.mxu0 0.0
    %486 = vmatmul.mubr.f32.gmra.mrb[0].mxu0 %v272
    %v487 = vpop.f32.mrb[0].mxu0
    %v488 = vadd.f32 %v119, %v487
    %v489 = vpop.f32.mrb[0].mxu0
    %490 = vmatprep.mubr.f32.mxu0 0.0
    %491 = vmatmul.mubr.f32.gmra.mrb[0].mxu0 %v275
    %v492 = vpop.f32.mrb[0].mxu0
    %v493 = vadd.f32 %v124, %v492
    %v494 = vpop.f32.mrb[0].mxu0
    %495 = vmatprep.mubr.f32.mxu0 0.0
    %496 = vmatmul.mubr.f32.gmra.mrb[0].mxu0 %v278
    %v497 = vpop.f32.mrb[0].mxu0
    %v498 = vadd.f32 %v129, %v497
    %v499 = vpop.f32.mrb[0].mxu0
    %500 = vmatprep.mubr.f32.mxu0 0.0
    %501 = vmatmul.mubr.f32.gmra.mrb[0].mxu0 %v281
    %v502 = vpop.f32.mrb[0].mxu0
    %v503 = vadd.f32 %v134, %v502
    %v504 = vpop.f32.mrb[0].mxu0
    %505 = vmatprep.mubr.f32.mxu0 0.0
    %506 = vmatmul.mubr.f32.gmra.mrb[0].mxu0 %v284
    %v507 = vpop.f32.mrb[0].mxu0
    %v508 = vadd.f32 %v139, %v507
    %v509 = vpop.f32.mrb[0].mxu0
    %510 = vmatprep.mubr.f32.mxu0 0.0
    %511 = vmatmul.mubr.f32.gmra.mrb[0].mxu0 %v287
    %v512 = vpop.f32.mrb[0].mxu0
    %v513 = vadd.f32 %v144, %v512
    %v514 = vpop.f32.mrb[0].mxu0
    %515 = vmatprep.mubr.f32.mxu0 0.0
    %516 = vmatmul.mubr.f32.gmra.mrb[0].mxu0 %v290
    %v517 = vpop.f32.mrb[0].mxu0
    %v518 = vadd.f32 %v149, %v517
    %v519 = vpop.f32.mrb[0].mxu0
    %520 = vmatprep.mubr.f32.mxu0 0.0
    %521 = vmatmul.mubr.f32.gmra.mrb[0].mxu0 %v293
    %v522 = vpop.f32.mrb[0].mxu0
    %v523 = vadd.f32 %v154, %v522
    %v524 = vpop.f32.mrb[0].mxu0
    %525 = vmatprep.mubr.f32.mxu0 0.0
    %526 = vmatmul.mubr.f32.gmra.mrb[0].mxu0 %v296
    %v527 = vpop.f32.mrb[0].mxu0
    %v528 = vadd.f32 %v159, %v527
    %v529 = vpop.f32.mrb[0].mxu0
    %530 = vmatprep.mubr.f32.mxu0 0.0
    %531 = vmatmul.mubr.f32.gmra.mrb[0].mxu0 %v299
    %v532 = vpop.f32.mrb[0].mxu0
    %v533 = vadd.f32 %v164, %v532
    %v534 = vpop.f32.mrb[0].mxu0
    %535 = vmatprep.mubr.f32.mxu0 0.0
    %536 = vmatmul.mubr.f32.gmra.mrb[0].mxu0 %v302
    %v537 = vpop.f32.mrb[0].mxu0
    %v538 = vadd.f32 %v169, %v537
    %v539 = vpop.f32.mrb[0].mxu0
    %540 = vmatprep.mubr.f32.mxu0 0.0
    %541 = vmatmul.mubr.f32.gmra.mrb[0].mxu0 %v305
    %v542 = vpop.f32.mrb[0].mxu0
    %v543 = vadd.f32 %v174, %v542
    %v544 = vpop.f32.mrb[0].mxu0
    %545 = vmatprep.mubr.f32.mxu0 0.0
    %546 = vmatmul.mubr.f32.gmra.mrb[0].mxu0 %v308
    %v547 = vpop.f32.mrb[0].mxu0
    %v548 = vadd.f32 %v179, %v547
    %v549 = vpop.f32.mrb[0].mxu0
    %550 = vmatprep.mubr.f32.mxu0 0.0
    %551 = vmatmul.mubr.f32.gmra.mrb[0].mxu0 %v311
    %v552 = vpop.f32.mrb[0].mxu0
    %v553 = vadd.f32 %v184, %v552
    %v554 = vpop.f32.mrb[0].mxu0
    %555 = vmatprep.mubr.f32.mxu0 0.0
    %556 = vmatmul.mubr.f32.gmra.mrb[0].mxu0 %v314
    %v557 = vpop.f32.mrb[0].mxu0
    %v558 = vadd.f32 %v189, %v557
    %v559 = vpop.f32.mrb[0].mxu0
    %560 = vmatprep.mubr.f32.mxu0 0.0
    %561 = vmatmul.mubr.f32.gmra.mrb[0].mxu0 %v317
    %v562 = vpop.f32.mrb[0].mxu0
    %v563 = vadd.f32 %v194, %v562
    %v564 = vpop.f32.mrb[0].mxu0
    %565 = vmatprep.mubr.f32.mxu0 0.0
    %566 = vmatmul.mubr.f32.gmra.mrb[0].mxu0 %v320
    %v567 = vpop.f32.mrb[0].mxu0
    %v568 = vadd.f32 %v199, %v567
    %v569 = vpop.f32.mrb[0].mxu0
    %570 = vmatprep.mubr.f32.mxu0 0.0
    %571 = vmatmul.mubr.f32.gmra.mrb[0].mxu0 %v323
    %v572 = vpop.f32.mrb[0].mxu0
    %v573 = vadd.f32 %v204, %v572
    %v574 = vpop.f32.mrb[0].mxu0
    %575 = vmatprep.mubr.f32.mxu0 0.0
    %576 = vmatmul.mubr.f32.gmra.mrb[0].mxu0 %v326
    %v577 = vpop.f32.mrb[0].mxu0
    %v578 = vadd.f32 %v209, %v577
    %v579 = vpop.f32.mrb[0].mxu0
    %580 = vmatprep.mubr.f32.mxu0 0.0
    %581 = vmatmul.mubr.f32.gmra.mrb[0].mxu0 %v329
    %v582 = vpop.f32.mrb[0].mxu0
    %v583 = vadd.f32 %v214, %v582
    %v584 = vpop.f32.mrb[0].mxu0
    %585 = vmatprep.mubr.f32.mxu0 0.0
    %586 = vmatmul.mubr.f32.gmra.mrb[0].mxu0 %v332
    %v587 = vpop.f32.mrb[0].mxu0
    %v588 = vadd.f32 %v219, %v587
    %v589 = vpop.f32.mrb[0].mxu0
    %590 = vmatprep.mubr.f32.mxu0 0.0
    %591 = vmatmul.mubr.f32.gmra.mrb[0].mxu0 %v335
    %v592 = vpop.f32.mrb[0].mxu0
    %v593 = vadd.f32 %v224, %v592
    %v594 = vpop.f32.mrb[0].mxu0
    %595 = vmatprep.mubr.f32.mxu0 0.0
    %596 = vmatmul.mubr.f32.gmra.mrb[0].mxu0 %v338
    %v597 = vpop.f32.mrb[0].mxu0
    %v598 = vadd.f32 %v229, %v597
    %v599 = vpop.f32.mrb[0].mxu0
    %600 = vmatprep.mubr.f32.mxu0 0.0
    %601 = vmatmul.mubr.f32.gmra.mrb[0].mxu0 %v341
    %v602 = vpop.f32.mrb[0].mxu0
    %v603 = vadd.f32 %v234, %v602
    %v604 = vpop.f32.mrb[0].mxu0
    %605 = vmatprep.mubr.f32.mxu0 0.0
    %606 = vmatmul.mubr.f32.gmra.mrb[0].mxu0 %v344
    %v607 = vpop.f32.mrb[0].mxu0
    %v608 = vadd.f32 %v239, %v607
    %v609 = vpop.f32.mrb[0].mxu0
    %610 = vmatprep.mubr.f32.mxu0 0.0
    %611 = vmatmul.mubr.f32.gmra.mrb[0].mxu0 %v347
    %v612 = vpop.f32.mrb[0].mxu0
    %v613 = vadd.f32 %v244, %v612
    %v614 = vpop.f32.mrb[0].mxu0
    %615 = vmatprep.mubr.f32.mxu0 0.0
    %616 = vmatmul.mubr.f32.gmra.mrb[0].mxu0 %v350
    %v617 = vpop.f32.mrb[0].mxu0
    %v618 = vadd.f32 %v249, %v617
    %v619 = vpop.f32.mrb[0].mxu0
    %620 = vmatprep.mubr.f32.mxu0 0.0
    %621 = vmatmul.mubr.f32.gmra.mrb[0].mxu0 %v353
    %v622 = vpop.f32.mrb[0].mxu0
    %v623 = vadd.f32 %v254, %v622
    %v624 = vpop.f32.mrb[0].mxu0
    %625 = vmatprep.mubr.f32.mxu0 0.0
    %626 = vmatmul.mubr.f32.gmra.mrb[0].mxu0 %v356
    %v627 = vpop.f32.mrb[0].mxu0
    %v628 = vadd.f32 %v259, %v627
    %v629 = vpop.f32.mrb[0].mxu0
    %630 = vdwg.mxu0
    %v631 = vmax.f32 %v473, 0.0
    %v632 = vmax.f32 %v478, 0.0
    %v633 = vmax.f32 %v483, 0.0
    %v634 = vmax.f32 %v488, 0.0
    %v635 = vmax.f32 %v493, 0.0
    %v636 = vmax.f32 %v498, 0.0
    %v637 = vmax.f32 %v503, 0.0
    %v638 = vmax.f32 %v508, 0.0
    %v639 = vmax.f32 %v513, 0.0
    %v640 = vmax.f32 %v518, 0.0
    %v641 = vmax.f32 %v523, 0.0
    %v642 = vmax.f32 %v528, 0.0
    %v643 = vmax.f32 %v533, 0.0
    %v644 = vmax.f32 %v538, 0.0
    %v645 = vmax.f32 %v543, 0.0
    %v646 = vmax.f32 %v548, 0.0
    %v647 = vmax.f32 %v553, 0.0
    %v648 = vmax.f32 %v558, 0.0
    %v649 = vmax.f32 %v563, 0.0
    %v650 = vmax.f32 %v568, 0.0
    %v651 = vmax.f32 %v573, 0.0
    %v652 = vmax.f32 %v578, 0.0
    %v653 = vmax.f32 %v583, 0.0
    %v654 = vmax.f32 %v588, 0.0
    %v655 = vmax.f32 %v593, 0.0
    %v656 = vmax.f32 %v598, 0.0
    %v657 = vmax.f32 %v603, 0.0
    %v658 = vmax.f32 %v608, 0.0
    %v659 = vmax.f32 %v613, 0.0
    %v660 = vmax.f32 %v618, 0.0
    %v661 = vmax.f32 %v623, 0.0
    %v662 = vmax.f32 %v628, 0.0
    %v663 = vld [vmem:[%s3] sm:$0xf]
    %v664 = vld [vmem:[%s4] sm:$0x3]
    %666 = vset.pattern.permute.xlu0 0
    %667 = vperm.xlu0 %666, %v664
    %v668 = vpop.permute.xlu0 %667
    %v672 = vunpack.c.l.s4 1983009808
    %v673 = vunpack.c.0.s8 %v672
    %v674 = vlaneseq
    %v675 = vshrl.u32 %v674, 7
    %v676 = vsub.s32 %v673, %v675
    %v677 = vrot.slane %v663, %v676
    %v678 = vcombine.high %v677, %v677
    %681 = vmatprep.subr.mxu0 0.0
    %682 = vmatpush1.msra.mxu0 %v631
    %683 = vmatprep.subr.mxu0 0.0
    %684 = vmatpush1.msra.mxu0 %v632
    %685 = vmatprep.subr.mxu0 0.0
    %686 = vmatpush1.msra.mxu0 %v633
    %687 = vmatprep.subr.mxu0 0.0
    %688 = vmatpush1.msra.mxu0 %v634
    %689 = vmatprep.subr.mxu0 0.0
    %690 = vmatpush1.msra.mxu0 %v635
    %691 = vmatprep.subr.mxu0 0.0
    %692 = vmatpush1.msra.mxu0 %v636
    %693 = vmatprep.subr.mxu0 0.0
    %694 = vmatpush1.msra.mxu0 %v637
    %695 = vmatprep.subr.mxu0 0.0
    %696 = vmatpush1.msra.mxu0 %v638
    %697 = vmatprep.subr.mxu0 0.0
    %698 = vmatpush1.msra.mxu0 %v639
    %699 = vmatprep.subr.mxu0 0.0
    %700 = vmatpush1.msra.mxu0 %v640
    %701 = vmatprep.subr.mxu0 0.0
    %702 = vmatpush1.msra.mxu0 %v641
    %703 = vmatprep.subr.mxu0 0.0
    %704 = vmatpush1.msra.mxu0 %v642
    %705 = vmatprep.subr.mxu0 0.0
    %706 = vmatpush1.msra.mxu0 %v643
    %707 = vmatprep.subr.mxu0 0.0
    %708 = vmatpush1.msra.mxu0 %v644
    %709 = vmatprep.subr.mxu0 0.0
    %710 = vmatpush1.msra.mxu0 %v645
    %711 = vmatprep.subr.mxu0 0.0
    %712 = vmatpush1.msra.mxu0 %v646
    %713 = vmatprep.subr.mxu0 0.0
    %714 = vmatpush1.msra.mxu0 %v647
    %715 = vmatprep.subr.mxu0 0.0
    %716 = vmatpush1.msra.mxu0 %v648
    %717 = vmatprep.subr.mxu0 0.0
    %718 = vmatpush1.msra.mxu0 %v649
    %719 = vmatprep.subr.mxu0 0.0
    %720 = vmatpush1.msra.mxu0 %v650
    %721 = vmatprep.subr.mxu0 0.0
    %722 = vmatpush1.msra.mxu0 %v651
    %723 = vmatprep.subr.mxu0 0.0
    %724 = vmatpush1.msra.mxu0 %v652
    %725 = vmatprep.subr.mxu0 0.0
    %726 = vmatpush1.msra.mxu0 %v653
    %727 = vmatprep.subr.mxu0 0.0
    %728 = vmatpush1.msra.mxu0 %v654
    %729 = vmatprep.subr.mxu0 0.0
    %730 = vmatpush1.msra.mxu0 %v655
    %731 = vmatprep.subr.mxu0 0.0
    %732 = vmatpush1.msra.mxu0 %v656
    %733 = vmatprep.subr.mxu0 0.0
    %734 = vmatpush1.msra.mxu0 %v657
    %735 = vmatprep.subr.mxu0 0.0
    %736 = vmatpush1.msra.mxu0 %v658
    %737 = vmatprep.subr.mxu0 0.0
    %738 = vmatpush1.msra.mxu0 %v659
    %739 = vmatprep.subr.mxu0 0.0
    %740 = vmatpush1.msra.mxu0 %v660
    %741 = vmatprep.subr.mxu0 0.0
    %742 = vmatpush1.msra.mxu0 %v661
    %743 = vmatprep.subr.mxu0 0.0
    %744 = vmatpush1.msra.mxu0 %v662
    %745 = vmatprep.mubr.f32.mxu0 %v678
    %746 = vmatmul.mubr.f32.gmra.mrb[0].mxu0 %v677
    %v747 = vpop.f32.mrb[0].mxu0
    %v748 = vadd.f32 %v668, %v747
    %v749 = vpop.f32.mrb[0].mxu0
    %750 = vdwg.mxu0
    %v751 = vtanh.pop %v748
    %v752 = vmul.f32 %v751, 2.0
    %753 = vst [vmem:[#allocation2] sm:$0x1] %v752
    %v754 = vmax.f32 %v748, 0.0
    %v755 = vand.u32 2147483647, %v748
    %v756 = vsub.f32 0.0, %v755
    %v757 = vmul.f32 %v756, 1.442695
    %v758 = vpow.pop %v757
    %v759 = vadd.f32 %v758, 1.0
    %v760 = vlog2.pop %v759
    %v761 = vmul.f32 %v760, 0.6931472
    %v762 = vmul.f32 -0.5, %v758
    %v763 = vadd.f32 %v762, 1.0
    %v764 = vmul.f32 %v763, %v758
    %v765 = vand.u32 2147483647, %v758
    %vm766 = vcmp.lt.f32.partialorder %v765, 0.0004427343
    %v767 = vsel %vm766, %v764, %v761
    %v768 = vadd.f32 %v754, %v767
    %769 = vst [vmem:[#allocation2] sm:$0x2] %v768
    // Predicated region
    $region22: #{tpu_custom_call.1} parent=1 // pred_check
      _
    $region23: #{tpu_custom_call.1} parent=1 // pred_check_branch
      %771 = sbr.rel (0) target = $region25
    $region24: #{tpu_custom_call.1} parent=1 // pred_region
      %s773 = ssub.s32 32, 32
      %774 = vsyncadd [#allocation3], %s773
      %s776 = sshll.u32 [#allocation2], 4
      %s777 = int_to_ptr.vmem [resolvable:$true] %s776
      %779 = dma.vmem_to_hbm [thread:$0]  %s777, 32, %s5, [#allocation3]
    $region25: #{tpu_custom_call.1} parent=1 // pred_fallthru
      _
    // Predicated region
    $region26: #{tpu_custom_call.1} parent=1 // pred_check
      _
    $region27: #{tpu_custom_call.1} parent=1 // pred_check_branch
      %781 = sbr.rel (0) target = $region29
    $region28: #{tpu_custom_call.1} parent=1 // pred_region
      %782 = dma.done [#allocation3], 32
    $region29: #{tpu_custom_call.1} parent=1 // pred_fallthru
      _
    %783 = vsyncpa [#allocation3], 1

</llo_original>
